<compile_context>
chip_gen: v7x
topology: tpu7x:2x2x1
jax: 0.10.0
libtpu: 0.0.40
codegen_flags: <defaults>
</compile_context>

<pallas_src>
import functools

import jax
import jax.numpy as jnp
from jax.experimental import pallas as pl
from jax.experimental.pallas import tpu as pltpu


def _scaled_sigmoid_kernel(x_ref, o_ref, *, scale):
    # Compute in f32 (no-op for f32 inputs, preserves precision for bf16).
    x = x_ref[...].astype(jnp.float32)
    o_ref[...] = (jax.nn.sigmoid(x) * scale).astype(o_ref.dtype)


_TARGET_TILE_BYTES = 2 * 1024 * 1024  # ~2 MiB per input tile.


@functools.partial(jax.jit, static_argnames=("scale",))
def scaled_sigmoid(x, scale=32.0):
    """Elementwise sigmoid(x) * scale via a Pallas TPU kernel."""
    orig_shape = x.shape
    n = x.size
    itemsize = jnp.dtype(x.dtype).itemsize

    # Pick the widest lane-dense slab width that divides the element count.
    lanes = None
    for cand in (1024, 512, 256, 128):
        if n % cand == 0:
            lanes = cand
            break

    if lanes is not None:
        rows = n // lanes
        x2d = x.reshape(rows, lanes)          # contiguous reshape: no copy under jit
        pad_tail = 0
    else:
        # Ragged fallback (size not a multiple of 128): minimal tail pad.
        # TODO(synk): could mask the tail in-kernel to avoid the pad copy.
        lanes = 128
        rows = -(-n // lanes)
        pad_tail = rows * lanes - n
        x2d = jnp.pad(x.reshape(-1), (0, pad_tail)).reshape(rows, lanes)

    # Row-block size targeting ~2 MiB per tile, sublane-aligned for the dtype.
    sublane = 8 * max(1, 4 // itemsize)       # 8 (f32) / 16 (bf16) / 32 (i8)
    target_rows = max(
        sublane,
        (_TARGET_TILE_BYTES // (lanes * itemsize)) // sublane * sublane,
    )
    block_rows = min(rows, target_rows)       # == rows (full dim) for small inputs

    grid = (pl.cdiv(rows, block_rows),)       # partial last block handled by Pallas

    out2d = pl.pallas_call(
        functools.partial(_scaled_sigmoid_kernel, scale=float(scale)),
        out_shape=jax.ShapeDtypeStruct((rows, lanes), x.dtype),
        grid_spec=pltpu.PrefetchScalarGridSpec(
            num_scalar_prefetch=0,
            grid=grid,
            in_specs=[pl.BlockSpec((block_rows, lanes), lambda i: (i, 0))],
            out_specs=pl.BlockSpec((block_rows, lanes), lambda i: (i, 0)),
        ),
        compiler_params=pltpu.CompilerParams(
            dimension_semantics=("parallel",),
        ),
    )(x2d)

    if pad_tail:
        return out2d.reshape(-1)[:n].reshape(orig_shape)
    return out2d.reshape(orig_shape)


if __name__ == "__main__":
    key = jax.random.PRNGKey(0)
    # Small NCHW input consistent with a conv-style activation map.
    x = jax.random.normal(key, (2, 4, 16, 16), dtype=jnp.float32)

    y = scaled_sigmoid(x, scale=32.0)
    y = jax.block_until_ready(y)

    # Reference check against plain JAX.
    y_ref = jax.nn.sigmoid(x) * 32.0
    assert y.shape == x.shape
    assert jnp.allclose(y, y_ref, atol=1e-5, rtol=1e-5), "mismatch vs reference"

    print("KERNEL_OK")
</pallas_src>

<mosaic_0001>
module attributes {stable_mosaic.version = 11 : i64} {
  func.func @_scaled_sigmoid_kernel(%arg0: i32, %arg1: memref<2x1024xf32, #tpu.memory_space<vmem>>, %arg2: memref<2x1024xf32, #tpu.memory_space<vmem>>) attributes {dimension_semantics = [#tpu.dimension_semantics<parallel>], iteration_bounds = array<i64: 1>, scalar_prefetch = 0 : i64, scratch_operands = 0 : i64, tpu.core_type = #tpu.core_type<tc>, window_params = [{transform_indices = @transform_0, window_bounds = array<i64: 2, 1024>}, {transform_indices = @transform_1, window_bounds = array<i64: 2, 1024>}]} {
    %c0 = arith.constant 0 : index
    %c0_0 = arith.constant 0 : index
    %0 = vector.load %arg1[%c0, %c0_0] : memref<2x1024xf32, #tpu.memory_space<vmem>>, vector<2x1024xf32>
    %1 = arith.negf %0 : vector<2x1024xf32>
    %2 = math.exp %1 : vector<2x1024xf32>
    %cst = arith.constant 1.000000e+00 : f32
    %3 = vector.broadcast %cst : f32 to vector<2x1024xf32>
    %4 = arith.addf %3, %2 : vector<2x1024xf32>
    %5 = arith.divf %3, %4 : vector<2x1024xf32>
    %cst_1 = arith.constant 3.200000e+01 : f32
    %6 = vector.broadcast %cst_1 : f32 to vector<2x1024xf32>
    %7 = arith.mulf %5, %6 : vector<2x1024xf32>
    %c0_2 = arith.constant 0 : index
    %c0_3 = arith.constant 0 : index
    %8 = vector.load %arg2[%c0_2, %c0_3] : memref<2x1024xf32, #tpu.memory_space<vmem>>, vector<2x1024xf32>
    tpu.vector_store %arg2[%c0_2, %c0_3], %7 {strides = array<i32>} : memref<2x1024xf32, #tpu.memory_space<vmem>>, vector<2x1024xf32>,
    return
  }
  func.func @transform_0(%arg0: i32) -> (i32, i32) {
    %c0_i32 = arith.constant 0 : i32
    %c0_i32_0 = arith.constant 0 : i32
    return %arg0, %c0_i32 : i32, i32
  }
  func.func @transform_1(%arg0: i32) -> (i32, i32) {
    %c0_i32 = arith.constant 0 : i32
    %c0_i32_0 = arith.constant 0 : i32
    return %arg0, %c0_i32 : i32, i32
  }
}

</mosaic_0001>

<llo_original>
// kernel: scaled_sigmoid.1
$region0: #{scaled_sigmoid.1}
  #allocation0 [shape = 'u32[]', space=smem, size = 0x4, offset = 0x4, fixed_abs, tag = 'smem constant byte address 0x4 - core index']
  #allocation1 [shape = 'u32[144,128]{1,0:T(1,128)}', space=vmem, size = 0x12000, scoped, tag = 'internal scratch']
  %s0 = inlined_call_operand.vmem [shape: f32[2,1024], index: 0, kind: input, shape index: {}]
  %s1 = inlined_call_operand.vmem [shape: f32[2,1024], index: 1, kind: output, shape index: {}]
  %s2 = sld [smem:[#allocation0]]
  $region14: #{scaled_sigmoid.1} parent=0
    _
  %s4 = ssub.s32 1, %s2
  %s5 = scalar_select 0, %s4, %s2
  // Predicated region
  $region2: #{scaled_sigmoid.1} parent=0 // pred_check
    _
  $region3: #{scaled_sigmoid.1} parent=0 // pred_check_branch
    %7 = sbr.rel (0) target = $region5
  $region4: #{scaled_sigmoid.1} parent=0 // pred_region
    _
  $region5: #{scaled_sigmoid.1} parent=0 // pred_fallthru
    _
  %v8 = vld [vmem:[%s0] sm:$0xff]
  %v9 = vld [vmem:[%s0 + $0x8] sm:$0xff]
  %v10 = vxor.u32 %v8, 2147483648
  %v11 = vxor.u32 %v9, 2147483648
  %v12 = vmul.f32 %v10, 1.442695
  %v13 = vpow.pop %v12
  %v14 = vmul.f32 %v11, 1.442695
  %v15 = vpow.pop %v14
  %v16 = vadd.f32 %v13, 1.0
  %v17 = vadd.f32 %v15, 1.0
  %v18 = vrcp.pop %v16
  %v19 = vmul.f32 1.0, %v18
  %v20 = vrcp.pop %v17
  %v21 = vmul.f32 1.0, %v20
  %v22 = vmul.f32 %v19, 32.0
  %v23 = vmul.f32 %v21, 32.0
  %24 = vst [vmem:[%s1] sm:$0xff] %v22
  %25 = vst [vmem:[%s1 + $0x8] sm:$0xff] %v23
  // Predicated region
  $region6: #{scaled_sigmoid.1} parent=0 // pred_check
    _
  $region7: #{scaled_sigmoid.1} parent=0 // pred_check_branch
    %27 = sbr.rel (0) target = $region9
  $region8: #{scaled_sigmoid.1} parent=0 // pred_region
    _
  $region9: #{scaled_sigmoid.1} parent=0 // pred_fallthru
    _
  // Predicated region
  $region10: #{scaled_sigmoid.1} parent=0 // pred_check
    _
  $region11: #{scaled_sigmoid.1} parent=0 // pred_check_branch
    %29 = sbr.rel (0) target = $region13
  $region12: #{scaled_sigmoid.1} parent=0 // pred_region
    _
  $region13: #{scaled_sigmoid.1} parent=0 // pred_fallthru
    _

</llo_original>
